<compile_context>
chip_gen: v6e
topology: v6e:2x2x1
jax: 0.10.0
libtpu: 0.0.40
codegen_flags: <defaults>
</compile_context>

<pallas_src>
import jax
import jax.numpy as jnp
from jax.experimental import pallas as pl
from jax.experimental.pallas import tpu as pltpu


# ---------------------------------------------------------------------------
# Kernel 1: MLM head transform (dense H->H, GELU, LayerNorm).  One batch row
# per grid step; epilogue math in f32 (safe on v5e's no-bf16 VPU/EUP), output
# stored in bf16 as the decoder-matmul operand.
# ---------------------------------------------------------------------------
def mlm_head_kernel(x_ref, w_dense_ref, b_dense_ref, gamma_ref, beta_ref, h_ref):
    x = x_ref[0]                                                   # (T, H) bf16
    h = jnp.dot(x, w_dense_ref[...], preferred_element_type=jnp.float32)
    h = h + b_dense_ref[...]                                       # (T, H) f32
    # TODO(synk): PyTorch RobertaLMHead uses the exact erf GELU; the tanh
    # approximation is used here for guaranteed Mosaic lowering (drift ~1e-3).
    h = jax.nn.gelu(h, approximate=True)
    mu = jnp.mean(h, axis=-1, keepdims=True)
    var = jnp.mean((h - mu) ** 2, axis=-1, keepdims=True)
    h = (h - mu) * jax.lax.rsqrt(var + 1e-5)
    h = h * gamma_ref[...] + beta_ref[...]
    h_ref[...] = h[None].astype(jnp.bfloat16)                      # (1, T, H)


# ---------------------------------------------------------------------------
# Kernel 2: decoder (H -> V tile) + SPLADE pooling.
# grid = (V // TV, B): w_dec tile index depends only on the outer V-tile axis,
# so it is NOT re-fetched while the inner batch axis iterates (weight reuse).
# ---------------------------------------------------------------------------
def splade_decoder_kernel(h_ref, mask_ref, w_dec_ref, b_dec_ref, out_ref):
    logits = jnp.dot(h_ref[0], w_dec_ref[...],                     # bf16 x bf16
                     preferred_element_type=jnp.float32)           # (T, TV) f32
    logits = logits + b_dec_ref[...]
    # log(1 + relu(x)) * mask, then max over the sequence (XLU reduce; cheap
    # relative to the MXU work).  No (T, V) intermediate is ever materialized.
    act = jnp.log(1.0 + jnp.maximum(logits, 0.0)) * mask_ref[0]    # (T, TV)
    out_ref[...] = jnp.max(act, axis=0, keepdims=True)             # (1, TV)


def splade_encode(tokens, params, *, tv=None):
    input_ids = tokens["input_ids"]              # (B, T) int32
    attention_mask = tokens["attention_mask"]    # (B, T) int32
    B, T = input_ids.shape
    H = params["tok_emb"].shape[-1]
    V = params["w_dec"].shape[-1]

    if tv is None:
        # TV sizing: keep double-buffered bf16 weight tiles + per-tile logits
        # a few MiB (smaller on v7x's 64 MiB VMEM, larger OK on v5e/v6e).
        tv = min(V, 2048)
    assert V % tv == 0 and tv % 128 == 0, "vocab tile must be lane-dense"

    # TODO(synk): the full RoBERTa transformer body is not replicated; hidden
    # states come from a deterministic synthetic embedding stack (JAX glue).
    # The MLM head + SPLADE pooling (the hot path) run in the Pallas kernels.
    emb = params["tok_emb"][input_ids] + params["pos_emb"][:T][None, :, :]
    hidden = jnp.tanh(emb).astype(jnp.bfloat16)                    # (B, T, H)

    # Drop-first-token implemented by zeroing its mask (identical result,
    # avoids a misaligned (B, T-1, H) HBM copy and keeps T a multiple of 8).
    mask = attention_mask.astype(jnp.float32).at[:, 0].set(0.0)[:, :, None]

    vmem_limit = 48 * 1024 * 1024  # explicit; below v7x's 64 MiB physical VMEM

    # ---- Stage 1: h = LN(gelu(hidden @ W_dense + b)) -----------------------
    h = pl.pallas_call(
        mlm_head_kernel,
        out_shape=jax.ShapeDtypeStruct((B, T, H), jnp.bfloat16),
        grid_spec=pltpu.PrefetchScalarGridSpec(
            num_scalar_prefetch=0,
            grid=(B,),
            in_specs=[
                pl.BlockSpec((1, T, H), lambda b: (b, 0, 0)),   # hidden (bf16)
                pl.BlockSpec((H, H), lambda b: (0, 0)),         # w_dense (bf16)
                pl.BlockSpec((1, H), lambda b: (0, 0)),         # b_dense
                pl.BlockSpec((1, H), lambda b: (0, 0)),         # ln gamma
                pl.BlockSpec((1, H), lambda b: (0, 0)),         # ln beta
            ],
            out_specs=pl.BlockSpec((1, T, H), lambda b: (b, 0, 0)),
        ),
        compiler_params=pltpu.CompilerParams(
            dimension_semantics=("parallel",),
            vmem_limit_bytes=vmem_limit,
        ),
    )(hidden, params["w_dense"], params["b_dense"],
      params["gamma"], params["beta"])

    # ---- Stage 2: streamed decoder + SPLADE max-pool ------------------------
    out = pl.pallas_call(
        splade_decoder_kernel,
        out_shape=jax.ShapeDtypeStruct((B, V), jnp.float32),
        grid_spec=pltpu.PrefetchScalarGridSpec(
            num_scalar_prefetch=0,
            grid=(V // tv, B),                      # V tile outer, batch inner
            in_specs=[
                pl.BlockSpec((1, T, H), lambda v, b: (b, 0, 0)),   # h (bf16)
                pl.BlockSpec((1, T, 1), lambda v, b: (b, 0, 0)),   # mask
                # If profiling shows exposed DMA on this stream, bump depth
                # with pipeline_mode=pl.Buffered(3).
                pl.BlockSpec((H, tv), lambda v, b: (0, v)),        # w_dec tile
                pl.BlockSpec((1, tv), lambda v, b: (0, v)),        # b_dec tile
            ],
            out_specs=pl.BlockSpec((1, tv), lambda v, b: (b, v)),
        ),
        compiler_params=pltpu.CompilerParams(
            # Both axes write disjoint output slices -> both parallel
            # (lets v7x split the (V-tile x B) grid over its 2 TensorCores).
            dimension_semantics=("parallel", "parallel"),
            vmem_limit_bytes=vmem_limit,
        ),
    )(h, mask, params["w_dec"], params["b_dec"])
    return out


def splade_encode_ref(tokens, params):
    """Pure-JAX reference of the same forward (same bf16 matmul operands)."""
    input_ids = tokens["input_ids"]
    attention_mask = tokens["attention_mask"]
    T = input_ids.shape[1]
    emb = params["tok_emb"][input_ids] + params["pos_emb"][:T][None, :, :]
    hidden = jnp.tanh(emb).astype(jnp.bfloat16)
    h = jnp.dot(hidden, params["w_dense"], preferred_element_type=jnp.float32)
    h = h + params["b_dense"]
    h = jax.nn.gelu(h, approximate=True)
    mu = jnp.mean(h, axis=-1, keepdims=True)
    var = jnp.mean((h - mu) ** 2, axis=-1, keepdims=True)
    h = (h - mu) * jax.lax.rsqrt(var + 1e-5)
    h = h * params["gamma"] + params["beta"]
    h = h.astype(jnp.bfloat16)
    logits = jnp.dot(h, params["w_dec"], preferred_element_type=jnp.float32)
    logits = logits + params["b_dec"]
    # Reference keeps the literal "drop first token" slicing of the PyTorch
    # module, which also validates the mask-zeroing trick used by the kernel.
    p_logits = logits[:, 1:, :]
    mask = attention_mask[:, 1:].astype(jnp.float32)[:, :, None]
    return jnp.max(jnp.log(1.0 + jnp.maximum(p_logits, 0.0)) * mask, axis=1)


def init_params(key, vocab, hidden, max_seq):
    k = jax.random.split(key, 4)
    return {
        "tok_emb": 0.02 * jax.random.normal(k[0], (vocab, hidden), jnp.float32),
        "pos_emb": 0.02 * jax.random.normal(k[1], (max_seq, hidden), jnp.float32),
        # Matmul weights stored in bf16: native MXU dtype; halves the HBM bytes
        # of the dominant decoder-weight stream.
        "w_dense": (0.05 * jax.random.normal(k[2], (hidden, hidden),
                                             jnp.float32)).astype(jnp.bfloat16),
        "b_dense": jnp.zeros((1, hidden), jnp.float32),
        "gamma": jnp.ones((1, hidden), jnp.float32),
        "beta": jnp.zeros((1, hidden), jnp.float32),
        "w_dec": (0.05 * jax.random.normal(k[3], (hidden, vocab),
                                           jnp.float32)).astype(jnp.bfloat16),
        "b_dec": jnp.zeros((1, vocab), jnp.float32),
    }


if __name__ == "__main__":
    # Small but tile-aligned demo shapes: batch=2, seq=8, hidden=128, vocab=512
    # with a vocab tile of 256 so the V-tiling path (grid (2, 2)) is exercised.
    B, T, H, V = 2, 8, 128, 512
    TV = 256

    key = jax.random.PRNGKey(0)
    k_ids, k_params = jax.random.split(key)

    params = init_params(k_params, vocab=V, hidden=H, max_seq=T)

    input_ids = jax.random.randint(k_ids, (B, T), 0, V, dtype=jnp.int32)
    attention_mask = jnp.array(
        [[1, 1, 1, 1, 1, 1, 1, 1],
         [1, 1, 1, 1, 1, 0, 0, 0]], dtype=jnp.int32)
    tokens = {"input_ids": input_ids, "attention_mask": attention_mask}

    out = splade_encode(tokens, params, tv=TV)
    out = jax.block_until_ready(out)

    ref = splade_encode_ref(tokens, params)
    assert out.shape == (B, V)
    assert jnp.allclose(out, ref, atol=1e-3, rtol=1e-3), "mismatch vs reference"

    print("KERNEL_OK")
</pallas_src>

<mosaic_0001>
module attributes {stable_mosaic.version = 11 : i64} {
  func.func @mlm_head_kernel(%arg0: i32, %arg1: memref<1x8x128xbf16, #tpu.memory_space<vmem>>, %arg2: memref<128x128xbf16, #tpu.memory_space<vmem>>, %arg3: memref<1x128xf32, #tpu.memory_space<vmem>>, %arg4: memref<1x128xf32, #tpu.memory_space<vmem>>, %arg5: memref<1x128xf32, #tpu.memory_space<vmem>>, %arg6: memref<1x8x128xbf16, #tpu.memory_space<vmem>>) attributes {dimension_semantics = [#tpu.dimension_semantics<parallel>], iteration_bounds = array<i64: 2>, scalar_prefetch = 0 : i64, scratch_operands = 0 : i64, tpu.core_type = #tpu.core_type<tc>, window_params = [{transform_indices = @transform_0, window_bounds = array<i64: 1, 8, 128>}, {pipeline_mode = #tpu.pipeline_mode<synchronous>, transform_indices = @transform_1, window_bounds = array<i64: 128, 128>}, {pipeline_mode = #tpu.pipeline_mode<synchronous>, transform_indices = @transform_2, window_bounds = array<i64: 1, 128>}, {pipeline_mode = #tpu.pipeline_mode<synchronous>, transform_indices = @transform_3, window_bounds = array<i64: 1, 128>}, {pipeline_mode = #tpu.pipeline_mode<synchronous>, transform_indices = @transform_4, window_bounds = array<i64: 1, 128>}, {transform_indices = @transform_5, window_bounds = array<i64: 1, 8, 128>}]} {
    %c0 = arith.constant 0 : index
    %c0_0 = arith.constant 0 : index
    %c0_1 = arith.constant 0 : index
    %0 = vector.load %arg1[%c0, %c0_0, %c0_1] : memref<1x8x128xbf16, #tpu.memory_space<vmem>>, vector<1x8x128xbf16>
    %1 = vector.shape_cast %0 : vector<1x8x128xbf16> to vector<8x128xbf16>
    %c0_2 = arith.constant 0 : index
    %c0_3 = arith.constant 0 : index
    %2 = vector.load %arg2[%c0_2, %c0_3] : memref<128x128xbf16, #tpu.memory_space<vmem>>, vector<128x128xbf16>
    %cst = arith.constant dense<0.000000e+00> : vector<8x128xf32>
    %3 = tpu.matmul %1, %2, %cst {dimension_numbers = #tpu.dot_dimension_numbers<[1], [0], [0], [1], [0, 0, 1, 1], [], []>} : vector<8x128xbf16>, vector<128x128xbf16>, vector<8x128xf32> -> vector<8x128xf32>
    %c0_4 = arith.constant 0 : index
    %c0_5 = arith.constant 0 : index
    %4 = vector.load %arg3[%c0_4, %c0_5] : memref<1x128xf32, #tpu.memory_space<vmem>>, vector<1x128xf32>
    %5 = vector.broadcast %4 : vector<1x128xf32> to vector<8x128xf32>
    %6 = arith.addf %3, %5 : vector<8x128xf32>
    %7 = arith.mulf %6, %6 : vector<8x128xf32>
    %8 = arith.mulf %6, %7 : vector<8x128xf32>
    %cst_6 = arith.constant 4.471500e-02 : f32
    %9 = vector.broadcast %cst_6 : f32 to vector<8x128xf32>
    %10 = arith.mulf %9, %8 : vector<8x128xf32>
    %11 = arith.addf %6, %10 : vector<8x128xf32>
    %cst_7 = arith.constant 0.797884583 : f32
    %12 = vector.broadcast %cst_7 : f32 to vector<8x128xf32>
    %13 = arith.mulf %12, %11 : vector<8x128xf32>
    %14 = math.tanh %13 : vector<8x128xf32>
    %cst_8 = arith.constant 1.000000e+00 : f32
    %15 = vector.broadcast %cst_8 : f32 to vector<8x128xf32>
    %16 = arith.addf %15, %14 : vector<8x128xf32>
    %cst_9 = arith.constant 5.000000e-01 : f32
    %17 = vector.broadcast %cst_9 : f32 to vector<8x128xf32>
    %18 = arith.mulf %17, %16 : vector<8x128xf32>
    %19 = arith.mulf %6, %18 : vector<8x128xf32>
    %cst_10 = arith.constant dense<0.000000e+00> : vector<8xf32>
    %20 = vector.multi_reduction <add>, %19, %cst_10 [1] : vector<8x128xf32> to vector<8xf32>
    %21 = vector.shape_cast %20 : vector<8xf32> to vector<8x1xf32>
    %cst_11 = arith.constant 1.280000e+02 : f32
    %22 = vector.broadcast %cst_11 : f32 to vector<8x1xf32>
    %23 = arith.divf %21, %22 : vector<8x1xf32>
    %24 = vector.broadcast %23 : vector<8x1xf32> to vector<8x128xf32>
    %25 = arith.subf %19, %24 : vector<8x128xf32>
    %26 = arith.mulf %25, %25 : vector<8x128xf32>
    %cst_12 = arith.constant dense<0.000000e+00> : vector<8xf32>
    %27 = vector.multi_reduction <add>, %26, %cst_12 [1] : vector<8x128xf32> to vector<8xf32>
    %28 = vector.shape_cast %27 : vector<8xf32> to vector<8x1xf32>
    %cst_13 = arith.constant 1.280000e+02 : f32
    %29 = vector.broadcast %cst_13 : f32 to vector<8x1xf32>
    %30 = arith.divf %28, %29 : vector<8x1xf32>
    %31 = vector.broadcast %23 : vector<8x1xf32> to vector<8x128xf32>
    %32 = arith.subf %19, %31 : vector<8x128xf32>
    %cst_14 = arith.constant 9.99999974E-6 : f32
    %33 = vector.broadcast %cst_14 : f32 to vector<8x1xf32>
    %34 = arith.addf %30, %33 : vector<8x1xf32>
    %35 = math.rsqrt %34 : vector<8x1xf32>
    %36 = vector.broadcast %35 : vector<8x1xf32> to vector<8x128xf32>
    %37 = arith.mulf %32, %36 : vector<8x128xf32>
    %c0_15 = arith.constant 0 : index
    %c0_16 = arith.constant 0 : index
    %38 = vector.load %arg4[%c0_15, %c0_16] : memref<1x128xf32, #tpu.memory_space<vmem>>, vector<1x128xf32>
    %39 = vector.broadcast %38 : vector<1x128xf32> to vector<8x128xf32>
    %40 = arith.mulf %37, %39 : vector<8x128xf32>
    %c0_17 = arith.constant 0 : index
    %c0_18 = arith.constant 0 : index
    %41 = vector.load %arg5[%c0_17, %c0_18] : memref<1x128xf32, #tpu.memory_space<vmem>>, vector<1x128xf32>
    %42 = vector.broadcast %41 : vector<1x128xf32> to vector<8x128xf32>
    %43 = arith.addf %40, %42 : vector<8x128xf32>
    %44 = vector.shape_cast %43 : vector<8x128xf32> to vector<1x8x128xf32>
    %45 = arith.truncf %44 : vector<1x8x128xf32> to vector<1x8x128xbf16>
    %c0_19 = arith.constant 0 : index
    %c0_20 = arith.constant 0 : index
    %c0_21 = arith.constant 0 : index
    %46 = vector.load %arg6[%c0_19, %c0_20, %c0_21] : memref<1x8x128xbf16, #tpu.memory_space<vmem>>, vector<1x8x128xbf16>
    tpu.vector_store %arg6[%c0_19, %c0_20, %c0_21], %45 {strides = array<i32>} : memref<1x8x128xbf16, #tpu.memory_space<vmem>>, vector<1x8x128xbf16>,
    return
  }
  func.func @transform_0(%arg0: i32) -> (i32, i32, i32) {
    %c0_i32 = arith.constant 0 : i32
    %c0_i32_0 = arith.constant 0 : i32
    %c0_i32_1 = arith.constant 0 : i32
    return %arg0, %c0_i32, %c0_i32_0 : i32, i32, i32
  }
  func.func @transform_1(%arg0: i32) -> (i32, i32) {
    %c0_i32 = arith.constant 0 : i32
    %c0_i32_0 = arith.constant 0 : i32
    %c0_i32_1 = arith.constant 0 : i32
    return %c0_i32, %c0_i32_0 : i32, i32
  }
  func.func @transform_2(%arg0: i32) -> (i32, i32) {
    %c0_i32 = arith.constant 0 : i32
    %c0_i32_0 = arith.constant 0 : i32
    %c0_i32_1 = arith.constant 0 : i32
    return %c0_i32, %c0_i32_0 : i32, i32
  }
  func.func @transform_3(%arg0: i32) -> (i32, i32) {
    %c0_i32 = arith.constant 0 : i32
    %c0_i32_0 = arith.constant 0 : i32
    %c0_i32_1 = arith.constant 0 : i32
    return %c0_i32, %c0_i32_0 : i32, i32
  }
  func.func @transform_4(%arg0: i32) -> (i32, i32) {
    %c0_i32 = arith.constant 0 : i32
    %c0_i32_0 = arith.constant 0 : i32
    %c0_i32_1 = arith.constant 0 : i32
    return %c0_i32, %c0_i32_0 : i32, i32
  }
  func.func @transform_5(%arg0: i32) -> (i32, i32, i32) {
    %c0_i32 = arith.constant 0 : i32
    %c0_i32_0 = arith.constant 0 : i32
    %c0_i32_1 = arith.constant 0 : i32
    return %arg0, %c0_i32, %c0_i32_0 : i32, i32, i32
  }
}

</mosaic_0001>

<llo_original>
// kernel: tpu_custom_call.1
$region0: #{tpu_custom_call.1}
  #allocation0 [shape = 'u32[]', space=smem, size = 0x4, offset = 0x4, fixed_abs, tag = 'smem constant byte address 0x4 - core index']
  #allocation1 [shape = 'u32[144,128]{1,0:T(1,128)}', space=vmem, size = 0x12000, scoped, tag = 'internal scratch']
  %s0 = inlined_call_operand.hbm [shape: bf16[2,8,128], index: 0, kind: input, shape index: {}]
  %s1 = inlined_call_operand.hbm [shape: bf16[128,128], index: 1, kind: input, shape index: {}]
  %s2 = inlined_call_operand.vmem [shape: f32[1,128], index: 2, kind: input, shape index: {}]
  %s3 = inlined_call_operand.vmem [shape: f32[1,128], index: 3, kind: input, shape index: {}]
  %s4 = inlined_call_operand.vmem [shape: f32[1,128], index: 4, kind: input, shape index: {}]
  %s5 = inlined_call_operand.hbm [shape: bf16[2,8,128], index: 5, kind: output, shape index: {}]
  %s6 = sld [smem:[#allocation0]]
  $region61: #{tpu_custom_call.1} parent=0
    _
  %s8 = ssub.s32 1, %s6
  %s9 = scalar_select 0, %s8, %s6
  $region1: #{tpu_custom_call.1} parent=0
    #allocation2 [shape = 'u8[4096]{0}', space=vmem, size = 0x1000, scoped, tag = 'input window, operand 0']
    #allocation3 [shape = 's32[2]{0}', space=sflag, size = 0x8, scoped, tag = 'scoped memory for tpu_custom_call.1']
    #allocation4 [shape = 's32[2]{0}', space=sflag, size = 0x8, scoped, tag = 'scoped memory for tpu_custom_call.1']
    #allocation5 [shape = 'u8[32768]{0}', space=vmem, size = 0x8000, scoped, tag = 'input window, operand 1, single buffered']
    #allocation6 [shape = 's32[1]{0}', space=sflag, size = 0x4, scoped, tag = 'scoped memory for tpu_custom_call.1']
    #allocation7 [shape = 'u8[4096]{0}', space=vmem, size = 0x1000, scoped, tag = 'output window, operand 0']
    %10 = vsyncpa [#allocation3], 0
    %s11 = scalar_lea.sflag [#allocation3], 1
    %12 = vsyncpa %s11, 0
    %13 = vsyncpa [#allocation6], 0
    %14 = vsyncpa [#allocation4], 0
    %s15 = scalar_lea.sflag [#allocation4], 1
    %16 = vsyncpa %s15, 0
    loop: start=0, step=1, limit=4
    $region2: #{tpu_custom_call.1} parent=1 // loop_pre_header
      _
    $region3: #{tpu_custom_call.1} parent=1 // loop_header
      %s18 = sphi 0, %s22
      %p19 = scmp.ge.s32.totalorder %s18, 4
      %s28 = sphi 0, %s30
      %s31 = sphi 0, %s28
      %s32 = sphi 0, %s31
      %s48 = sphi 0, %s32
      %s52 = sphi 0, %s52
      %s54 = sphi 0, %s52
      %s55 = sphi 0, %s54
      %s69 = sphi 0, %s55
      %s73 = sphi 0, %s73
      %s75 = sphi 0, %s73
      %s76 = sphi 0, %s75
      %s90 = sphi 0, %s76
      %s94 = sphi 0, %s94
      %s96 = sphi 0, %s94
      %s97 = sphi 0, %s96
      %s111 = sphi 0, %s97
      %s115 = sphi 0, %s115
      %s117 = sphi 0, %s115
      %s118 = sphi 0, %s117
      %s132 = sphi 0, %s118
      %s138 = sphi 0, %s140
      %s141 = sphi 0, %s138
      %s142 = sphi 0, %s141
      %s158 = sphi 0, %s142
    $region4: #{tpu_custom_call.1} parent=1 // loop_header_branch
      %21 = sbr.rel (%p19) target = $region8
    $region5: #{tpu_custom_call.1} parent=1 // loop_body
      %s23 = ssub.s32 %s18, 1
      %s24 = ssub.s32 %s18, 2
      %s25 = sadd.s32 %s18, 1
      %s26 = ssub.s32 %s18, %s25
      %p27 = scmp.eq.s32.totalorder %s26, 0
      %s29 = sadd.s32 %s28, 1
      %s30 = scalar_select %p27, %s28, %s29
      %p33 = pneg %p27
      %p34 = scmp.eq.s32.totalorder %s18, 1
      %p35 = por %p33, %p34
      %p36 = scmp.ne.s32.totalorder %s28, %s31
      %p37 = scmp.eq.s32.totalorder %s18, 0
      %p38 = por %p36, %p37
      %p39 = scmp.ne.s32.totalorder %s28, %s31
      %p40 = scmp.eq.s32.totalorder %s23, 1
      %p41 = por %p39, %p40
      %p42 = scmp.ne.s32.totalorder %s31, %s32
      %p43 = scmp.eq.s32.totalorder %s23, 0
      %p44 = por %p42, %p43
      %p45 = scmp.ne.s32.totalorder %s31, %s32
      %p46 = scmp.eq.s32.totalorder %s24, 1
      %p47 = por %p45, %p46
      %p49 = scmp.ne.s32.totalorder %s32, %s48
      %p50 = scmp.eq.s32.totalorder %s24, 0
      %p51 = por %p49, %p50
      %s53 = sadd.s32 %s52, 1
      %p56 = scmp.eq.s32.totalorder %s18, 1
      %p57 = scmp.ne.s32.totalorder %s52, %s54
      %p58 = scmp.eq.s32.totalorder %s18, 0
      %p59 = por %p57, %p58
      %p60 = scmp.ne.s32.totalorder %s52, %s54
      %p61 = scmp.eq.s32.totalorder %s23, 1
      %p62 = por %p60, %p61
      %p63 = scmp.ne.s32.totalorder %s54, %s55
      %p64 = scmp.eq.s32.totalorder %s23, 0
      %p65 = por %p63, %p64
      %p66 = scmp.ne.s32.totalorder %s54, %s55
      %p67 = scmp.eq.s32.totalorder %s24, 1
      %p68 = por %p66, %p67
      %p70 = scmp.ne.s32.totalorder %s55, %s69
      %p71 = scmp.eq.s32.totalorder %s24, 0
      %p72 = por %p70, %p71
      %s74 = sadd.s32 %s73, 1
      %p77 = scmp.eq.s32.totalorder %s18, 1
      %p78 = scmp.ne.s32.totalorder %s73, %s75
      %p79 = scmp.eq.s32.totalorder %s18, 0
      %p80 = por %p78, %p79
      %p81 = scmp.ne.s32.totalorder %s73, %s75
      %p82 = scmp.eq.s32.totalorder %s23, 1
      %p83 = por %p81, %p82
      %p84 = scmp.ne.s32.totalorder %s75, %s76
      %p85 = scmp.eq.s32.totalorder %s23, 0
      %p86 = por %p84, %p85
      %p87 = scmp.ne.s32.totalorder %s75, %s76
      %p88 = scmp.eq.s32.totalorder %s24, 1
      %p89 = por %p87, %p88
      %p91 = scmp.ne.s32.totalorder %s76, %s90
      %p92 = scmp.eq.s32.totalorder %s24, 0
      %p93 = por %p91, %p92
      %s95 = sadd.s32 %s94, 1
      %p98 = scmp.eq.s32.totalorder %s18, 1
      %p99 = scmp.ne.s32.totalorder %s94, %s96
      %p100 = scmp.eq.s32.totalorder %s18, 0
      %p101 = por %p99, %p100
      %p102 = scmp.ne.s32.totalorder %s94, %s96
      %p103 = scmp.eq.s32.totalorder %s23, 1
      %p104 = por %p102, %p103
      %p105 = scmp.ne.s32.totalorder %s96, %s97
      %p106 = scmp.eq.s32.totalorder %s23, 0
      %p107 = por %p105, %p106
      %p108 = scmp.ne.s32.totalorder %s96, %s97
      %p109 = scmp.eq.s32.totalorder %s24, 1
      %p110 = por %p108, %p109
      %p112 = scmp.ne.s32.totalorder %s97, %s111
      %p113 = scmp.eq.s32.totalorder %s24, 0
      %p114 = por %p112, %p113
      %s116 = sadd.s32 %s115, 1
      %p119 = scmp.eq.s32.totalorder %s18, 1
      %p120 = scmp.ne.s32.totalorder %s115, %s117
      %p121 = scmp.eq.s32.totalorder %s18, 0
      %p122 = por %p120, %p121
      %p123 = scmp.ne.s32.totalorder %s115, %s117
      %p124 = scmp.eq.s32.totalorder %s23, 1
      %p125 = por %p123, %p124
      %p126 = scmp.ne.s32.totalorder %s117, %s118
      %p127 = scmp.eq.s32.totalorder %s23, 0
      %p128 = por %p126, %p127
      %p129 = scmp.ne.s32.totalorder %s117, %s118
      %p130 = scmp.eq.s32.totalorder %s24, 1
      %p131 = por %p129, %p130
      %p133 = scmp.ne.s32.totalorder %s118, %s132
      %p134 = scmp.eq.s32.totalorder %s24, 0
      %p135 = por %p133, %p134
      %s136 = ssub.s32 %s18, %s25
      %p137 = scmp.eq.s32.totalorder %s136, 0
      %s139 = sadd.s32 %s138, 1
      %s140 = scalar_select %p137, %s138, %s139
      %p143 = pneg %p137
      %p144 = scmp.eq.s32.totalorder %s18, 1
      %p145 = por %p143, %p144
      %p146 = scmp.ne.s32.totalorder %s138, %s141
      %p147 = scmp.eq.s32.totalorder %s18, 0
      %p148 = por %p146, %p147
      %p149 = scmp.ne.s32.totalorder %s138, %s141
      %p150 = scmp.eq.s32.totalorder %s23, 1
      %p151 = por %p149, %p150
      %p152 = scmp.ne.s32.totalorder %s141, %s142
      %p153 = scmp.eq.s32.totalorder %s23, 0
      %p154 = por %p152, %p153
      %p155 = scmp.ne.s32.totalorder %s141, %s142
      %p156 = scmp.eq.s32.totalorder %s24, 1
      %p157 = por %p155, %p156
      %p159 = scmp.ne.s32.totalorder %s142, %s158
      %p160 = scmp.eq.s32.totalorder %s24, 0
      %p161 = por %p159, %p160
      %p162 = scmp.le.s32.totalorder 1, %s18
      %p163 = scmp.lt.s32.totalorder %s18, 3
      %p164 = pnand %p162, %p163
      %p165 = pneg %p164
      // Predicated region
      $region9: #{tpu_custom_call.1} parent=5 // pred_check
        _
      $region10: #{tpu_custom_call.1} parent=5 // pred_check_branch
        %167 = sbr.rel (%p164) target = $region12
      $region11: #{tpu_custom_call.1} parent=5 // pred_region
        %s168 = ssub.s32 %s18, 1
        // Predicated region
        $region13: #{tpu_custom_call.1} parent=11 // pred_check
          %p169 = pneg %p65
        $region14: #{tpu_custom_call.1} parent=11 // pred_check_branch
          %171 = sbr.rel (%p169) target = $region16
        $region15: #{tpu_custom_call.1} parent=11 // pred_region
          %s173 = ssub.s32 1024, 1024
          %174 = vsyncadd [#allocation6], %s173
          %s175 = sshll.u32 [#allocation5], 4
          %s176 = int_to_ptr.vmem [resolvable:$true] %s175
          %181 = dma.hbm_to_vmem [thread:$0]  %s1, 1024, %s176, [#allocation6], 64, 64, 4
        $region16: #{tpu_custom_call.1} parent=11 // pred_fallthru
          _
        // Predicated region
        $region17: #{tpu_custom_call.1} parent=11 // pred_check
          %p182 = pneg %p86
        $region18: #{tpu_custom_call.1} parent=11 // pred_check_branch
          %184 = sbr.rel (%p182) target = $region20
        $region19: #{tpu_custom_call.1} parent=11 // pred_region
          _
        $region20: #{tpu_custom_call.1} parent=11 // pred_fallthru
          _
        // Predicated region
        $region21: #{tpu_custom_call.1} parent=11 // pred_check
          %p185 = pneg %p107
        $region22: #{tpu_custom_call.1} parent=11 // pred_check_branch
          %187 = sbr.rel (%p185) target = $region24
        $region23: #{tpu_custom_call.1} parent=11 // pred_region
          _
        $region24: #{tpu_custom_call.1} parent=11 // pred_fallthru
          _
        // Predicated region
        $region25: #{tpu_custom_call.1} parent=11 // pred_check
          %p188 = pneg %p128
        $region26: #{tpu_custom_call.1} parent=11 // pred_check_branch
          %190 = sbr.rel (%p188) target = $region28
        $region27: #{tpu_custom_call.1} parent=11 // pred_region
          _
        $region28: #{tpu_custom_call.1} parent=11 // pred_fallthru
          _
      $region12: #{tpu_custom_call.1} parent=5 // pred_fallthru
        _
      %p191 = scmp.lt.s32.totalorder %s18, 2
      // Predicated region
      $region29: #{tpu_custom_call.1} parent=5 // pred_check
        %p192 = pneg %p191
      $region30: #{tpu_custom_call.1} parent=5 // pred_check_branch
        %194 = sbr.rel (%p192) target = $region32
      $region31: #{tpu_custom_call.1} parent=5 // pred_region
        // Predicated region
        $region33: #{tpu_custom_call.1} parent=31 // pred_check
          %p195 = pneg %p38
        $region34: #{tpu_custom_call.1} parent=31 // pred_check_branch
          %197 = sbr.rel (%p195) target = $region36
        $region35: #{tpu_custom_call.1} parent=31 // pred_region
          %s198 = sand.u32 %s28, 1
          %s199 = scalar_lea.sflag [#allocation3], %s198
          %s200 = sand.u32 %s28, 1
          %s201 = smul.addr %s200, 4
          %s202 = scalar_lea.vmem [#allocation2], %s201
          %s204 = ssub.s32 64, 64
          %205 = vsyncadd %s199, %s204
          %s206 = smul.addr %s18, 64
          %s207 = scalar_lea.hbm %s0, %s206
          %s209 = sshll.u32 %s202, 4
          %s210 = int_to_ptr.vmem [resolvable:$true] %s209
          %212 = dma.hbm_to_vmem [thread:$0]  %s207, 64, %s210, %s199
        $region36: #{tpu_custom_call.1} parent=31 // pred_fallthru
          _
      $region32: #{tpu_custom_call.1} parent=5 // pred_fallthru
        _
      %p213 = scmp.le.s32.totalorder 1, %s18
      %p214 = scmp.lt.s32.totalorder %s18, 3
      %p215 = pnand %p213, %p214
      %p216 = pneg %p215
      // Predicated region
      $region37: #{tpu_custom_call.1} parent=5 // pred_check
        _
      $region38: #{tpu_custom_call.1} parent=5 // pred_check_branch
        %218 = sbr.rel (%p215) target = $region40
      $region39: #{tpu_custom_call.1} parent=5 // pred_region
        %s219 = ssub.s32 %s18, 1
        %s220 = sand.u32 %s31, 1
        %s221 = scalar_lea.sflag [#allocation3], %s220
        %s222 = sand.u32 %s31, 1
        %s223 = smul.addr %s222, 4
        %s224 = scalar_lea.vmem [#allocation2], %s223
        // Predicated region
        $region41: #{tpu_custom_call.1} parent=39 // pred_check
          %p225 = pneg %p44
        $region42: #{tpu_custom_call.1} parent=39 // pred_check_branch
          %227 = sbr.rel (%p225) target = $region44
        $region43: #{tpu_custom_call.1} parent=39 // pred_region
          %228 = dma.done %s221, 64
        $region44: #{tpu_custom_call.1} parent=39 // pred_fallthru
          _
        // Predicated region
        $region45: #{tpu_custom_call.1} parent=39 // pred_check
          %p229 = pneg %p65
        $region46: #{tpu_custom_call.1} parent=39 // pred_check_branch
          %231 = sbr.rel (%p229) target = $region48
        $region47: #{tpu_custom_call.1} parent=39 // pred_region
          %232 = dma.done [#allocation6], 1024
        $region48: #{tpu_custom_call.1} parent=39 // pred_fallthru
          _
        %s233 = sand.u32 %s31, 1
        %s234 = scalar_lea.sflag [#allocation3], %s233
        %s235 = sand.u32 %s31, 1
        %s236 = smul.addr %s235, 4
        %s237 = scalar_lea.vmem [#allocation2], %s236
        %p238 = pneg %p44
        %p239 = pneg %p41
        %p240 = pneg %p65
        %p241 = pneg %p62
        %p242 = pneg %p86
        %p243 = pneg %p83
        %p244 = pneg %p107
        %p245 = pneg %p104
        %p246 = pneg %p128
        %p247 = pneg %p125
        %p248 = pneg %p154
        %p249 = pneg %p151
        %s250 = sand.u32 %s141, 1
        %s251 = scalar_lea.sflag [#allocation4], %s250
        %s252 = sand.u32 %s141, 1
        %s253 = smul.addr %s252, 4
        %s254 = scalar_lea.vmem [#allocation7], %s253
        %v256 = vld [vmem:[%s224] sm:$0xf]
        %v257 = vld [vmem:[#allocation5] sm:$0xf]
        %v258 = vld [vmem:[#allocation5 + $0x4] sm:$0xf]
        %v259 = vld [vmem:[#allocation5 + $0x8] sm:$0xf]
        %v260 = vld [vmem:[#allocation5 + $0xc] sm:$0xf]
        %v261 = vld [vmem:[#allocation5 + $0x10] sm:$0xf]
        %v262 = vld [vmem:[#allocation5 + $0x14] sm:$0xf]
        %v263 = vld [vmem:[#allocation5 + $0x18] sm:$0xf]
        %v264 = vld [vmem:[#allocation5 + $0x1c] sm:$0xf]
        %v265 = vld [vmem:[#allocation5 + $0x20] sm:$0xf]
        %v266 = vld [vmem:[#allocation5 + $0x24] sm:$0xf]
        %v267 = vld [vmem:[#allocation5 + $0x28] sm:$0xf]
        %v268 = vld [vmem:[#allocation5 + $0x2c] sm:$0xf]
        %v269 = vld [vmem:[#allocation5 + $0x30] sm:$0xf]
        %v270 = vld [vmem:[#allocation5 + $0x34] sm:$0xf]
        %v271 = vld [vmem:[#allocation5 + $0x38] sm:$0xf]
        %v272 = vld [vmem:[#allocation5 + $0x3c] sm:$0xf]
        %v273 = vld [vmem:[%s2] sm:$0x1]
        %v275 = vlaneseq
        %v276 = vshrl.u32 %v275, 7
        %v277 = vsub.s32 0, %v276
        %v278 = vrot.slane %v273, %v277
        %v296 = vunpack.c.l.b16 %v257
        %v297 = vunpack.c.l.b16 %v258
        %v298 = vunpack.c.l.b16 %v259
        %v299 = vunpack.c.l.b16 %v260
        %v300 = vunpack.c.l.b16 %v261
        %v301 = vunpack.c.l.b16 %v262
        %v302 = vunpack.c.l.b16 %v263
        %v303 = vunpack.c.l.b16 %v264
        %v304 = vunpack.c.l.b16 %v265
        %v305 = vunpack.c.l.b16 %v266
        %v306 = vunpack.c.l.b16 %v267
        %v307 = vunpack.c.l.b16 %v268
        %v308 = vunpack.c.l.b16 %v269
        %v309 = vunpack.c.l.b16 %v270
        %v310 = vunpack.c.l.b16 %v271
        %v311 = vunpack.c.l.b16 %v272
        %v312 = vpack.c.b16 %v297, %v296
        %v313 = vpack.c.b16 %v299, %v298
        %v314 = vpack.c.b16 %v301, %v300
        %v315 = vpack.c.b16 %v303, %v302
        %v316 = vpack.c.b16 %v305, %v304
        %v317 = vpack.c.b16 %v307, %v306
        %v318 = vpack.c.b16 %v309, %v308
        %v319 = vpack.c.b16 %v311, %v310
        %328 = vmatprep.subr.bf16.mxu0 0
        %329 = vmatpush1.bf16.msra.mxu0 %v319
        %330 = vmatprep.subr.bf16.mxu0 0
        %331 = vmatpush1.bf16.msra.mxu0 %v318
        %332 = vmatprep.subr.bf16.mxu0 0
        %333 = vmatpush1.bf16.msra.mxu0 %v317
        %334 = vmatprep.subr.bf16.mxu0 0
        %335 = vmatpush1.bf16.msra.mxu0 %v316
        %336 = vmatprep.subr.bf16.mxu0 0
        %337 = vmatpush1.bf16.msra.mxu0 %v315
        %338 = vmatprep.subr.bf16.mxu0 0
        %339 = vmatpush1.bf16.msra.mxu0 %v314
        %340 = vmatprep.subr.bf16.mxu0 0
        %341 = vmatpush1.bf16.msra.mxu0 %v313
        %342 = vmatprep.subr.bf16.mxu0 0
        %343 = vmatpush1.bf16.msra.mxu0 %v312
        %344 = vmatprep.subr.bf16.mxu0 0
        %345 = vmatpush2.bf16.msra.mxu0 0
        %346 = vmatprep.subr.bf16.mxu0 0
        %347 = vmatpush2.bf16.msra.mxu0 0
        %348 = vmatprep.subr.bf16.mxu0 0
        %349 = vmatpush2.bf16.msra.mxu0 0
        %350 = vmatprep.subr.bf16.mxu0 0
        %351 = vmatpush2.bf16.msra.mxu0 0
        %352 = vmatprep.subr.bf16.mxu0 0
        %353 = vmatpush2.bf16.msra.mxu0 0
        %354 = vmatprep.subr.bf16.mxu0 0
        %355 = vmatpush2.bf16.msra.mxu0 0
        %356 = vmatprep.subr.bf16.mxu0 0
        %357 = vmatpush2.bf16.msra.mxu0 0
        %358 = vmatprep.subr.bf16.mxu0 0
        %359 = vmatpush2.bf16.msra.mxu0 0
        %360 = vmatprep.mubr.bf16.mxu0 0
        %361 = vmatmul.mubr.bf16.gmra.mxu0 %v256
        %v362 = vpop.f32.mrf.mxu0
        %v363 = vadd.f32 %v278, %v362
        %v364 = vpop.f32.mrf.mxu0
        %v365 = vpop.f32.mrf.mxu0
        %v366 = vpop.f32.mrf.mxu0
        %367 = vdwg.mxu0
        %v368 = vmul.f32 %v363, %v363
        %v369 = vmul.f32 %v363, %v368
        %v370 = vmul.f32 %v369, 0.044715
        %v371 = vadd.f32 %v363, %v370
        %v372 = vmul.f32 %v371, 0.7978846
        %v373 = vtanh.pop %v372
        %v374 = vadd.f32 %v373, 1.0
        %v375 = vmul.f32 %v374, 0.5
        %v376 = vmul.f32 %v363, %v375
        %377 = vadd.xlane.f32.xlu0 %v376
        %v378 = vpop.xlane.xlu0 %377
        %v379 = vrcp.pop 128.0
        %v380 = vmul.f32 %v378, %v379
        %v381 = vsub.f32 %v376, %v380
        %v382 = vmul.f32 %v381, %v381
        %383 = vadd.xlane.f32.xlu0 %v382
        %v384 = vpop.xlane.xlu0 %383
        %v385 = vmul.f32 %v384, %v379
        %v386 = vadd.f32 %v385, 1e-05
        %v387 = vrsqrt.pop %v386
        %v388 = vmul.f32 %v381, %v387
        %v389 = vld [vmem:[%s3] sm:$0x1]
        %v391 = vlaneseq
        %v392 = vshrl.u32 %v391, 7
        %v393 = vsub.s32 0, %v392
        %v394 = vrot.slane %v389, %v393
        %v396 = vmul.f32 %v388, %v394
        %v397 = vld [vmem:[%s4] sm:$0x1]
        %v399 = vlaneseq
        %v400 = vshrl.u32 %v399, 7
        %v401 = vsub.s32 0, %v400
        %v402 = vrot.slane %v397, %v401
        %v404 = vadd.f32 %v396, %v402
        %v405 = vpack.c.bf16 %v404, %v404
        %406 = vst [vmem:[%s254] sm:$0xf] %v405
        %s407 = sand.u32 %s141, 1
        %s408 = scalar_lea.sflag [#allocation4], %s407
        %s409 = sand.u32 %s141, 1
        %s410 = smul.addr %s409, 4
        %s411 = scalar_lea.vmem [#allocation7], %s410
        // Predicated region
        $region49: #{tpu_custom_call.1} parent=39 // pred_check
          %p412 = pneg %p151
        $region50: #{tpu_custom_call.1} parent=39 // pred_check_branch
          %414 = sbr.rel (%p412) target = $region52
        $region51: #{tpu_custom_call.1} parent=39 // pred_region
          %s416 = ssub.s32 64, 64
          %417 = vsyncadd %s408, %s416
          %s418 = smul.addr %s23, 64
          %s419 = scalar_lea.hbm %s5, %s418
          %s421 = sshll.u32 %s411, 4
          %s422 = int_to_ptr.vmem [resolvable:$true] %s421
          %424 = dma.vmem_to_hbm [thread:$0]  %s422, 64, %s419, %s408
        $region52: #{tpu_custom_call.1} parent=39 // pred_fallthru
          _
      $region40: #{tpu_custom_call.1} parent=5 // pred_fallthru
        _
      %p425 = scmp.le.s32.totalorder 2, %s18
      // Predicated region
      $region53: #{tpu_custom_call.1} parent=5 // pred_check
        %p426 = pneg %p425
      $region54: #{tpu_custom_call.1} parent=5 // pred_check_branch
        %428 = sbr.rel (%p426) target = $region56
      $region55: #{tpu_custom_call.1} parent=5 // pred_region
        %s429 = ssub.s32 %s18, 2
        // Predicated region
        $region57: #{tpu_custom_call.1} parent=55 // pred_check
          %p430 = pneg %p157
        $region58: #{tpu_custom_call.1} parent=55 // pred_check_branch
          %432 = sbr.rel (%p430) target = $region60
        $region59: #{tpu_custom_call.1} parent=55 // pred_region
          %s433 = sand.u32 %s142, 1
          %s434 = scalar_lea.sflag [#allocation4], %s433
          %s435 = sand.u32 %s142, 1
          %s436 = smul.addr %s435, 4
          %s437 = scalar_lea.vmem [#allocation7], %s436
          %438 = dma.done %s434, 64
        $region60: #{tpu_custom_call.1} parent=55 // pred_fallthru
          _
      $region56: #{tpu_custom_call.1} parent=5 // pred_fallthru
        _
    $region6: #{tpu_custom_call.1} parent=1 // loop_footer
      %s22 = sadd.s32 1, %s18
    $region7: #{tpu_custom_call.1} parent=1 // loop_footer_branch
      %17 = sbr.rel target = $region3
    $region8: #{tpu_custom_call.1} parent=1 // loop_exit
      _
    %439 = vsyncpa [#allocation3], 1
    %s440 = scalar_lea.sflag [#allocation3], 1
    %441 = vsyncpa %s440, 1
    %442 = vsyncpa [#allocation6], 1
    %443 = vsyncpa [#allocation4], 1
    %s444 = scalar_lea.sflag [#allocation4], 1
    %445 = vsyncpa %s444, 1

</llo_original>
